<compile_context>
chip_gen: v7x
topology: tpu7x:2x2x1
jax: 0.10.0
libtpu: 0.0.40
codegen_flags: <defaults>
</compile_context>

<pallas_src>
import math

import jax
import jax.numpy as jnp
from jax import lax
from jax.experimental import pallas as pl
from jax.experimental.pallas import tpu as pltpu


def _make_dummy_kernel(n_chunks: int, cb: int):
    """Build the fused Dummy forward kernel for a given in-block chunking."""

    def kernel(x_ref, t_ref, w1_ref, b1_ref, w2_ref, b2_ref,
               freqs_ref, phase_ref, o_ref):
        w1 = w1_ref[...]          # [H, F]
        b1 = b1_ref[...]          # [H, 1]
        w2 = w2_ref[...]          # [F, H]
        b2 = b2_ref[...]          # [1, F]
        freqs = freqs_ref[...]    # [H, 1]  f32
        phase = phase_ref[...]    # [H, 1]  f32 (0 | pi/2 -> fused sin/cos)

        def compute(xc, tc):
            # xc: [cb, F] batch-major input chunk; tc: [1, cb] f32 times.
            # l1: contract on F -> feature-major hidden [H, cb]; the tiny
            # 5-wide operand transpose happens in-VMEM on the XLU (has slack).
            y = lax.dot_general(w1, xc, (((1,), (1,)), ((), ())),
                                preferred_element_type=jnp.float32)
            # Fused SineEncoding: one [H, cb] transcendental, no concatenate.
            # cos(x) == sin(x + pi/2) (ULP-level difference only).
            enc = jnp.sin(tc * freqs + phase)
            y = jnp.maximum(y + b1 + enc, 0.0)
            # l2: contract on H -> [cb, F]; the block is written back directly
            # in the module's native [B, F] layout (no wrapper transpose).
            out = lax.dot_general(y, w2, (((0,), (1,)), ((), ())),
                                  preferred_element_type=jnp.float32)
            return out + b2

        if n_chunks == 1:
            o_ref[...] = compute(
                x_ref[...], t_ref[...].astype(jnp.float32)).astype(o_ref.dtype)
        else:
            def body(c, carry):
                s = pl.multiple_of(c * cb, cb)
                xc = x_ref[pl.ds(s, cb), :]
                tc = t_ref[:, pl.ds(s, cb)].astype(jnp.float32)
                o_ref[pl.ds(s, cb), :] = compute(xc, tc).astype(o_ref.dtype)
                return carry
            lax.fori_loop(0, n_chunks, body, 0, unroll=True)

    return kernel


def dummy_forward(x_t, t, w1, b1, w2, b2, freqs_full, phase, *,
                  block_b=16384, chunk_b=2048):
    """Forward of Dummy(with_label=False).

    x_t: [B, F] (native layout), t: [B] or [B, 1].  Returns [B, F] in x_t.dtype.
    """
    B, F = x_t.shape
    H = w1.shape[0]
    dtype = x_t.dtype

    # Keep the time-encoding math in f32 regardless of the activation dtype.
    # Reshape [B] -> [1, B] is metadata-only (no HBM copy).
    t_row = jnp.reshape(t, (1, B)).astype(jnp.float32)

    # Sanitize tiling knobs: chunk multiple of 128, block multiple of chunk.
    chunk_b = max(128, (chunk_b // 128) * 128)
    block_b = max(chunk_b, (block_b // chunk_b) * chunk_b)

    if B < 2 * chunk_b:
        tb, cb, n_chunks = B, B, 1              # single block, straight-line
    else:
        tb = min(block_b, (B // chunk_b) * chunk_b)
        cb = chunk_b
        n_chunks = tb // cb
    grid = (pl.cdiv(B, tb),)                    # ragged last block is masked

    cost = pl.CostEstimate(
        flops=4 * B * F * H,                    # two F<->H matmuls
        transcendentals=B * H,                  # fused sin/cos encoding
        bytes_accessed=4 * (2 * B * F + B + 2 * H * F + 3 * H + F),
    )

    out = pl.pallas_call(
        _make_dummy_kernel(n_chunks, cb),
        out_shape=jax.ShapeDtypeStruct((B, F), dtype),
        grid=grid,
        in_specs=[
            pl.BlockSpec((tb, F), lambda i: (i, 0)),   # x      : streamed, [B,F]
            pl.BlockSpec((1, tb), lambda i: (0, i)),   # t      : streamed
            pl.BlockSpec((H, F), lambda i: (0, 0)),    # w1     : VMEM-resident
            pl.BlockSpec((H, 1), lambda i: (0, 0)),    # b1
            pl.BlockSpec((F, H), lambda i: (0, 0)),    # w2
            pl.BlockSpec((1, F), lambda i: (0, 0)),    # b2
            pl.BlockSpec((H, 1), lambda i: (0, 0)),    # freqs_full
            pl.BlockSpec((H, 1), lambda i: (0, 0)),    # phase
        ],
        out_specs=pl.BlockSpec((tb, F), lambda i: (i, 0)),
        compiler_params=pltpu.CompilerParams(
            dimension_semantics=("parallel",),         # multi-block -> both TCs on v7x
            vmem_limit_bytes=32 * 1024 * 1024,         # safe on v5e/v6e/v7x
        ),
        cost_estimate=cost,
    )(x_t, t_row, w1, b1, w2, b2, freqs_full, phase)
    return out


def make_params(features, hidden, key):
    """Deterministic params, PyTorch Linear-style init."""
    k1, k2, k3, k4 = jax.random.split(key, 4)
    bound1 = 1.0 / math.sqrt(features)
    bound2 = 1.0 / math.sqrt(hidden)
    w1 = jax.random.uniform(k1, (hidden, features), jnp.float32, -bound1, bound1)
    b1 = jax.random.uniform(k2, (hidden, 1), jnp.float32, -bound1, bound1)
    w2 = jax.random.uniform(k3, (features, hidden), jnp.float32, -bound2, bound2)
    b2 = jax.random.uniform(k4, (1, features), jnp.float32, -bound2, bound2)

    omega = 1e3
    half = hidden // 2
    freqs_half = omega ** (-jnp.linspace(0.0, 1.0, half, dtype=jnp.float32))
    freqs_full = jnp.concatenate([freqs_half, freqs_half]).reshape(hidden, 1)
    phase = jnp.concatenate(
        [jnp.zeros((half,), jnp.float32),
         jnp.full((half,), math.pi / 2, jnp.float32)]).reshape(hidden, 1)
    return w1, b1, w2, b2, freqs_full, phase, freqs_half


def reference_forward(x_t, t, w1, b1, w2, b2, freqs_half):
    """Pure-JAX reference of the PyTorch forward (canonical sin/cos concat)."""
    y = x_t @ w1.T + b1.reshape(1, -1)
    tf = jnp.reshape(t, (-1, 1)).astype(jnp.float32) * freqs_half.reshape(1, -1)
    enc = jnp.concatenate([jnp.sin(tf), jnp.cos(tf)], axis=-1)
    y = jnp.maximum(y + enc, 0.0)
    return y @ w2.T + b2.reshape(1, -1)


if __name__ == "__main__":
    F, H = 5, 64
    key = jax.random.PRNGKey(0)
    kp, kx1, kt1, kx2, kt2, kx3, kt3 = jax.random.split(key, 7)
    w1, b1, w2, b2, freqs_full, phase, freqs_half = make_params(F, H, kp)

    # Case 1: tiny batch -> single block, straight-line compute.
    B1 = 8
    x1 = jax.random.normal(kx1, (B1, F), jnp.float32)
    t1 = jax.random.uniform(kt1, (B1,), jnp.float32)
    out1 = jax.block_until_ready(
        dummy_forward(x1, t1, w1, b1, w2, b2, freqs_full, phase))
    ref1 = reference_forward(x1, t1, w1, b1, w2, b2, freqs_half)
    assert out1.shape == (B1, F)
    assert jnp.allclose(out1, ref1, atol=1e-5, rtol=1e-5), "mismatch (B=8)"

    # Case 2: mid batch -> still a single block at default tiling.
    B2 = 200
    x2 = jax.random.normal(kx2, (B2, F), jnp.float32)
    t2 = jax.random.uniform(kt2, (B2,), jnp.float32)
    out2 = jax.block_until_ready(
        dummy_forward(x2, t2, w1, b1, w2, b2, freqs_full, phase))
    ref2 = reference_forward(x2, t2, w1, b1, w2, b2, freqs_half)
    assert out2.shape == (B2, F)
    assert jnp.allclose(out2, ref2, atol=1e-5, rtol=1e-5), "mismatch (B=200)"

    # Case 3: small block/chunk overrides -> multi-step parallel grid, ragged
    # (masked) last block, and the unrolled in-block chunk loop.
    B3 = 600
    x3 = jax.random.normal(kx3, (B3, F), jnp.float32)
    t3 = jax.random.uniform(kt3, (B3,), jnp.float32)
    out3 = jax.block_until_ready(
        dummy_forward(x3, t3, w1, b1, w2, b2, freqs_full, phase,
                      block_b=256, chunk_b=128))
    ref3 = reference_forward(x3, t3, w1, b1, w2, b2, freqs_half)
    assert out3.shape == (B3, F)
    assert jnp.allclose(out3, ref3, atol=1e-5, rtol=1e-5), "mismatch (B=600)"

    print("KERNEL_OK")
</pallas_src>

<mosaic_0001>
module attributes {stable_mosaic.version = 11 : i64} {
  func.func @kernel(%arg0: i32, %arg1: memref<8x5xf32, #tpu.memory_space<vmem>>, %arg2: memref<1x8xf32, #tpu.memory_space<vmem>>, %arg3: memref<64x5xf32, #tpu.memory_space<vmem>>, %arg4: memref<64x1xf32, #tpu.memory_space<vmem>>, %arg5: memref<5x64xf32, #tpu.memory_space<vmem>>, %arg6: memref<1x5xf32, #tpu.memory_space<vmem>>, %arg7: memref<64x1xf32, #tpu.memory_space<vmem>>, %arg8: memref<64x1xf32, #tpu.memory_space<vmem>>, %arg9: memref<8x5xf32, #tpu.memory_space<vmem>>) attributes {dimension_semantics = [#tpu.dimension_semantics<parallel>], iteration_bounds = array<i64: 1>, scalar_prefetch = 0 : i64, scratch_operands = 0 : i64, tpu.core_type = #tpu.core_type<tc>, window_params = [{transform_indices = @transform_0, window_bounds = array<i64: 8, 5>}, {transform_indices = @transform_1, window_bounds = array<i64: 1, 8>}, {pipeline_mode = #tpu.pipeline_mode<synchronous>, transform_indices = @transform_2, window_bounds = array<i64: 64, 5>}, {pipeline_mode = #tpu.pipeline_mode<synchronous>, transform_indices = @transform_3, window_bounds = array<i64: 64, 1>}, {pipeline_mode = #tpu.pipeline_mode<synchronous>, transform_indices = @transform_4, window_bounds = array<i64: 5, 64>}, {pipeline_mode = #tpu.pipeline_mode<synchronous>, transform_indices = @transform_5, window_bounds = array<i64: 1, 5>}, {pipeline_mode = #tpu.pipeline_mode<synchronous>, transform_indices = @transform_6, window_bounds = array<i64: 64, 1>}, {pipeline_mode = #tpu.pipeline_mode<synchronous>, transform_indices = @transform_7, window_bounds = array<i64: 64, 1>}, {transform_indices = @transform_8, window_bounds = array<i64: 8, 5>}]} {
    %c0 = arith.constant 0 : index
    %c0_0 = arith.constant 0 : index
    %0 = vector.load %arg3[%c0, %c0_0] : memref<64x5xf32, #tpu.memory_space<vmem>>, vector<64x5xf32>
    %c0_1 = arith.constant 0 : index
    %c0_2 = arith.constant 0 : index
    %1 = vector.load %arg4[%c0_1, %c0_2] : memref<64x1xf32, #tpu.memory_space<vmem>>, vector<64x1xf32>
    %c0_3 = arith.constant 0 : index
    %c0_4 = arith.constant 0 : index
    %2 = vector.load %arg5[%c0_3, %c0_4] : memref<5x64xf32, #tpu.memory_space<vmem>>, vector<5x64xf32>
    %c0_5 = arith.constant 0 : index
    %c0_6 = arith.constant 0 : index
    %3 = vector.load %arg6[%c0_5, %c0_6] : memref<1x5xf32, #tpu.memory_space<vmem>>, vector<1x5xf32>
    %c0_7 = arith.constant 0 : index
    %c0_8 = arith.constant 0 : index
    %4 = vector.load %arg7[%c0_7, %c0_8] : memref<64x1xf32, #tpu.memory_space<vmem>>, vector<64x1xf32>
    %c0_9 = arith.constant 0 : index
    %c0_10 = arith.constant 0 : index
    %5 = vector.load %arg8[%c0_9, %c0_10] : memref<64x1xf32, #tpu.memory_space<vmem>>, vector<64x1xf32>
    %c0_11 = arith.constant 0 : index
    %c0_12 = arith.constant 0 : index
    %6 = vector.load %arg1[%c0_11, %c0_12] : memref<8x5xf32, #tpu.memory_space<vmem>>, vector<8x5xf32>
    %c0_13 = arith.constant 0 : index
    %c0_14 = arith.constant 0 : index
    %7 = vector.load %arg2[%c0_13, %c0_14] : memref<1x8xf32, #tpu.memory_space<vmem>>, vector<1x8xf32>
    %cst = arith.constant dense<0.000000e+00> : vector<64x8xf32>
    %8 = tpu.matmul %0, %6, %cst {dimension_numbers = #tpu.dot_dimension_numbers<[1], [1], [0], [0], [0, 0, 1, 0], [], []>} : vector<64x5xf32>, vector<8x5xf32>, vector<64x8xf32> -> vector<64x8xf32>
    %9 = vector.broadcast %7 : vector<1x8xf32> to vector<64x8xf32>
    %10 = vector.broadcast %4 : vector<64x1xf32> to vector<64x8xf32>
    %11 = arith.mulf %9, %10 : vector<64x8xf32>
    %12 = vector.broadcast %5 : vector<64x1xf32> to vector<64x8xf32>
    %13 = arith.addf %11, %12 : vector<64x8xf32>
    %14 = math.sin %13 : vector<64x8xf32>
    %15 = vector.broadcast %1 : vector<64x1xf32> to vector<64x8xf32>
    %16 = arith.addf %8, %15 : vector<64x8xf32>
    %17 = arith.addf %16, %14 : vector<64x8xf32>
    %cst_15 = arith.constant 0.000000e+00 : f32
    %18 = vector.broadcast %cst_15 : f32 to vector<64x8xf32>
    %19 = arith.maximumf %17, %18 : vector<64x8xf32>
    %cst_16 = arith.constant dense<0.000000e+00> : vector<8x5xf32>
    %20 = tpu.matmul %19, %2, %cst_16 {dimension_numbers = #tpu.dot_dimension_numbers<[0], [1], [1], [0], [0, 1, 1, 0], [], []>} : vector<64x8xf32>, vector<5x64xf32>, vector<8x5xf32> -> vector<8x5xf32>
    %21 = vector.broadcast %3 : vector<1x5xf32> to vector<8x5xf32>
    %22 = arith.addf %20, %21 : vector<8x5xf32>
    %c0_17 = arith.constant 0 : index
    %c0_18 = arith.constant 0 : index
    %23 = vector.load %arg9[%c0_17, %c0_18] : memref<8x5xf32, #tpu.memory_space<vmem>>, vector<8x5xf32>
    tpu.vector_store %arg9[%c0_17, %c0_18], %22 {strides = array<i32>} : memref<8x5xf32, #tpu.memory_space<vmem>>, vector<8x5xf32>,
    return
  }
  func.func @transform_0(%arg0: i32) -> (i32, i32) {
    %c0_i32 = arith.constant 0 : i32
    %c0_i32_0 = arith.constant 0 : i32
    return %arg0, %c0_i32 : i32, i32
  }
  func.func @transform_1(%arg0: i32) -> (i32, i32) {
    %c0_i32 = arith.constant 0 : i32
    %c0_i32_0 = arith.constant 0 : i32
    return %c0_i32, %arg0 : i32, i32
  }
  func.func @transform_2(%arg0: i32) -> (i32, i32) {
    %c0_i32 = arith.constant 0 : i32
    %c0_i32_0 = arith.constant 0 : i32
    %c0_i32_1 = arith.constant 0 : i32
    return %c0_i32, %c0_i32_0 : i32, i32
  }
  func.func @transform_3(%arg0: i32) -> (i32, i32) {
    %c0_i32 = arith.constant 0 : i32
    %c0_i32_0 = arith.constant 0 : i32
    %c0_i32_1 = arith.constant 0 : i32
    return %c0_i32, %c0_i32_0 : i32, i32
  }
  func.func @transform_4(%arg0: i32) -> (i32, i32) {
    %c0_i32 = arith.constant 0 : i32
    %c0_i32_0 = arith.constant 0 : i32
    %c0_i32_1 = arith.constant 0 : i32
    return %c0_i32, %c0_i32_0 : i32, i32
  }
  func.func @transform_5(%arg0: i32) -> (i32, i32) {
    %c0_i32 = arith.constant 0 : i32
    %c0_i32_0 = arith.constant 0 : i32
    %c0_i32_1 = arith.constant 0 : i32
    return %c0_i32, %c0_i32_0 : i32, i32
  }
  func.func @transform_6(%arg0: i32) -> (i32, i32) {
    %c0_i32 = arith.constant 0 : i32
    %c0_i32_0 = arith.constant 0 : i32
    %c0_i32_1 = arith.constant 0 : i32
    return %c0_i32, %c0_i32_0 : i32, i32
  }
  func.func @transform_7(%arg0: i32) -> (i32, i32) {
    %c0_i32 = arith.constant 0 : i32
    %c0_i32_0 = arith.constant 0 : i32
    %c0_i32_1 = arith.constant 0 : i32
    return %c0_i32, %c0_i32_0 : i32, i32
  }
  func.func @transform_8(%arg0: i32) -> (i32, i32) {
    %c0_i32 = arith.constant 0 : i32
    %c0_i32_0 = arith.constant 0 : i32
    return %arg0, %c0_i32 : i32, i32
  }
}

</mosaic_0001>

<llo_original>
// kernel: tpu_custom_call.1
$region0: #{tpu_custom_call.1}
  #allocation0 [shape = 'u32[]', space=smem, size = 0x4, offset = 0x4, fixed_abs, tag = 'smem constant byte address 0x4 - core index']
  #allocation1 [shape = 'u32[144,128]{1,0:T(1,128)}', space=vmem, size = 0x12000, scoped, tag = 'internal scratch']
  %s0 = inlined_call_operand.vmem [shape: f32[8,5], index: 0, kind: input, shape index: {}]
  %s1 = inlined_call_operand.vmem [shape: f32[1,8], index: 1, kind: input, shape index: {}]
  %s2 = inlined_call_operand.vmem [shape: f32[64,5], index: 2, kind: input, shape index: {}]
  %s3 = inlined_call_operand.vmem [shape: f32[64,1], index: 3, kind: input, shape index: {}]
  %s4 = inlined_call_operand.vmem [shape: f32[5,64], index: 4, kind: input, shape index: {}]
  %s5 = inlined_call_operand.vmem [shape: f32[1,5], index: 5, kind: input, shape index: {}]
  %s6 = inlined_call_operand.vmem [shape: f32[64,1], index: 6, kind: input, shape index: {}]
  %s7 = inlined_call_operand.vmem [shape: f32[64,1], index: 7, kind: input, shape index: {}]
  %s8 = inlined_call_operand.hbm [shape: f32[8,5], index: 8, kind: output, shape index: {}]
  %s9 = sld [smem:[#allocation0]]
  $region42: #{tpu_custom_call.1} parent=0
    _
  %s11 = ssub.s32 1, %s9
  %s12 = scalar_select 0, %s11, %s9
  $region1: #{tpu_custom_call.1} parent=0
    #allocation2 [shape = 'u8[4096]{0}', space=vmem, size = 0x1000, scoped, tag = 'output window, operand 0, single buffered']
    #allocation3 [shape = 's32[1]{0}', space=sflag, size = 0x4, scoped, tag = 'scoped memory for tpu_custom_call.1']
    %13 = vsyncpa [#allocation3], 0
    // Predicated region
    $region2: #{tpu_custom_call.1} parent=1 // pred_check
      _
    $region3: #{tpu_custom_call.1} parent=1 // pred_check_branch
      %15 = sbr.rel (0) target = $region5
    $region4: #{tpu_custom_call.1} parent=1 // pred_region
      _
    $region5: #{tpu_custom_call.1} parent=1 // pred_fallthru
      _
    // Predicated region
    $region6: #{tpu_custom_call.1} parent=1 // pred_check
      _
    $region7: #{tpu_custom_call.1} parent=1 // pred_check_branch
      %17 = sbr.rel (0) target = $region9
    $region8: #{tpu_custom_call.1} parent=1 // pred_region
      _
    $region9: #{tpu_custom_call.1} parent=1 // pred_fallthru
      _
    // Predicated region
    $region10: #{tpu_custom_call.1} parent=1 // pred_check
      _
    $region11: #{tpu_custom_call.1} parent=1 // pred_check_branch
      %19 = sbr.rel (0) target = $region13
    $region12: #{tpu_custom_call.1} parent=1 // pred_region
      _
    $region13: #{tpu_custom_call.1} parent=1 // pred_fallthru
      _
    // Predicated region
    $region14: #{tpu_custom_call.1} parent=1 // pred_check
      _
    $region15: #{tpu_custom_call.1} parent=1 // pred_check_branch
      %21 = sbr.rel (0) target = $region17
    $region16: #{tpu_custom_call.1} parent=1 // pred_region
      _
    $region17: #{tpu_custom_call.1} parent=1 // pred_fallthru
      _
    // Predicated region
    $region18: #{tpu_custom_call.1} parent=1 // pred_check
      _
    $region19: #{tpu_custom_call.1} parent=1 // pred_check_branch
      %23 = sbr.rel (0) target = $region21
    $region20: #{tpu_custom_call.1} parent=1 // pred_region
      _
    $region21: #{tpu_custom_call.1} parent=1 // pred_fallthru
      _
    // Predicated region
    $region22: #{tpu_custom_call.1} parent=1 // pred_check
      _
    $region23: #{tpu_custom_call.1} parent=1 // pred_check_branch
      %25 = sbr.rel (0) target = $region25
    $region24: #{tpu_custom_call.1} parent=1 // pred_region
      _
    $region25: #{tpu_custom_call.1} parent=1 // pred_fallthru
      _
    // Predicated region
    $region26: #{tpu_custom_call.1} parent=1 // pred_check
      _
    $region27: #{tpu_custom_call.1} parent=1 // pred_check_branch
      %27 = sbr.rel (0) target = $region29
    $region28: #{tpu_custom_call.1} parent=1 // pred_region
      _
    $region29: #{tpu_custom_call.1} parent=1 // pred_fallthru
      _
    // Predicated region
    $region30: #{tpu_custom_call.1} parent=1 // pred_check
      _
    $region31: #{tpu_custom_call.1} parent=1 // pred_check_branch
      %29 = sbr.rel (0) target = $region33
    $region32: #{tpu_custom_call.1} parent=1 // pred_region
      _
    $region33: #{tpu_custom_call.1} parent=1 // pred_fallthru
      _
    %v30 = vld [vmem:[%s2] sm:$0xff]
    %v31 = vld [vmem:[%s2 + $0x8] sm:$0xff]
    %v32 = vld [vmem:[%s2 + $0x10] sm:$0xff]
    %v33 = vld [vmem:[%s2 + $0x18] sm:$0xff]
    %v34 = vld [vmem:[%s2 + $0x20] sm:$0xff]
    %v35 = vld [vmem:[%s2 + $0x28] sm:$0xff]
    %v36 = vld [vmem:[%s2 + $0x30] sm:$0xff]
    %v37 = vld [vmem:[%s2 + $0x38] sm:$0xff]
    %v38 = vld [vmem:[%s3] sm:$0xff]
    %v39 = vld [vmem:[%s3 + $0x8] sm:$0xff]
    %v40 = vld [vmem:[%s3 + $0x10] sm:$0xff]
    %v41 = vld [vmem:[%s3 + $0x18] sm:$0xff]
    %v42 = vld [vmem:[%s3 + $0x20] sm:$0xff]
    %v43 = vld [vmem:[%s3 + $0x28] sm:$0xff]
    %v44 = vld [vmem:[%s3 + $0x30] sm:$0xff]
    %v45 = vld [vmem:[%s3 + $0x38] sm:$0xff]
    %v46 = vld [vmem:[%s4] sm:$0x1f]
    %v47 = vld [vmem:[%s5] sm:$0x1]
    %v48 = vld [vmem:[%s6] sm:$0xff]
    %v49 = vld [vmem:[%s6 + $0x8] sm:$0xff]
    %v50 = vld [vmem:[%s6 + $0x10] sm:$0xff]
    %v51 = vld [vmem:[%s6 + $0x18] sm:$0xff]
    %v52 = vld [vmem:[%s6 + $0x20] sm:$0xff]
    %v53 = vld [vmem:[%s6 + $0x28] sm:$0xff]
    %v54 = vld [vmem:[%s6 + $0x30] sm:$0xff]
    %v55 = vld [vmem:[%s6 + $0x38] sm:$0xff]
    %v56 = vld [vmem:[%s7] sm:$0xff]
    %v57 = vld [vmem:[%s7 + $0x8] sm:$0xff]
    %v58 = vld [vmem:[%s7 + $0x10] sm:$0xff]
    %v59 = vld [vmem:[%s7 + $0x18] sm:$0xff]
    %v60 = vld [vmem:[%s7 + $0x20] sm:$0xff]
    %v61 = vld [vmem:[%s7 + $0x28] sm:$0xff]
    %v62 = vld [vmem:[%s7 + $0x30] sm:$0xff]
    %v63 = vld [vmem:[%s7 + $0x38] sm:$0xff]
    %v64 = vld [vmem:[%s0] sm:$0xff]
    %v65 = vld [vmem:[%s1] sm:$0x1]
    %v67 = vlaneseq
    %v68 = vshrl.u32 %v67, 7
    %v69 = vsub.s32 0, %v68
    %v70 = vrot.slane %v65, %v69
    %73 = vset.pattern.permute.xlu0 0
    %74 = vperm.xlu0 %73, %v48
    %v75 = vpop.permute.xlu0 %74
    %78 = vset.pattern.permute.xlu0 0
    %79 = vperm.xlu0 %78, %v49
    %v80 = vpop.permute.xlu0 %79
    %83 = vset.pattern.permute.xlu0 0
    %84 = vperm.xlu0 %83, %v50
    %v85 = vpop.permute.xlu0 %84
    %88 = vset.pattern.permute.xlu0 0
    %89 = vperm.xlu0 %88, %v51
    %v90 = vpop.permute.xlu0 %89
    %93 = vset.pattern.permute.xlu0 0
    %94 = vperm.xlu0 %93, %v52
    %v95 = vpop.permute.xlu0 %94
    %98 = vset.pattern.permute.xlu0 0
    %99 = vperm.xlu0 %98, %v53
    %v100 = vpop.permute.xlu0 %99
    %103 = vset.pattern.permute.xlu0 0
    %104 = vperm.xlu0 %103, %v54
    %v105 = vpop.permute.xlu0 %104
    %108 = vset.pattern.permute.xlu0 0
    %109 = vperm.xlu0 %108, %v55
    %v110 = vpop.permute.xlu0 %109
    %v112 = vmul.f32 %v70, %v75
    %v113 = vmul.f32 %v70, %v80
    %v114 = vmul.f32 %v70, %v85
    %v115 = vmul.f32 %v70, %v90
    %v116 = vmul.f32 %v70, %v95
    %v117 = vmul.f32 %v70, %v100
    %v118 = vmul.f32 %v70, %v105
    %v119 = vmul.f32 %v70, %v110
    %121 = vset.pattern.permute.xlu0 0
    %122 = vperm.xlu0 %121, %v56
    %v123 = vpop.permute.xlu0 %122
    %126 = vset.pattern.permute.xlu0 0
    %127 = vperm.xlu0 %126, %v57
    %v128 = vpop.permute.xlu0 %127
    %131 = vset.pattern.permute.xlu0 0
    %132 = vperm.xlu0 %131, %v58
    %v133 = vpop.permute.xlu0 %132
    %136 = vset.pattern.permute.xlu0 0
    %137 = vperm.xlu0 %136, %v59
    %v138 = vpop.permute.xlu0 %137
    %141 = vset.pattern.permute.xlu0 0
    %142 = vperm.xlu0 %141, %v60
    %v143 = vpop.permute.xlu0 %142
    %146 = vset.pattern.permute.xlu0 0
    %147 = vperm.xlu0 %146, %v61
    %v148 = vpop.permute.xlu0 %147
    %151 = vset.pattern.permute.xlu0 0
    %152 = vperm.xlu0 %151, %v62
    %v153 = vpop.permute.xlu0 %152
    %156 = vset.pattern.permute.xlu0 0
    %157 = vperm.xlu0 %156, %v63
    %v158 = vpop.permute.xlu0 %157
    %v160 = vadd.f32 %v112, %v123
    %v161 = vadd.f32 %v113, %v128
    %v162 = vadd.f32 %v114, %v133
    %v163 = vadd.f32 %v115, %v138
    %v164 = vadd.f32 %v116, %v143
    %v165 = vadd.f32 %v117, %v148
    %v166 = vadd.f32 %v118, %v153
    %v167 = vadd.f32 %v119, %v158
    %v168 = vand.u32 2147483647, %v160
    %vm169 = vcmp.le.f32.partialorder %v168, 0.7853982
    %vm170 = vcmp.lt.s32.totalorder %v160, 0
    %v171 = vand.u32 %v160, 2139095040
    %v172 = vshrl.u32 %v171, 23
    %v173 = vsub.s32 %v172, 127
    %v174 = vand.u32 2147483647, %v160
    %v175 = vand.u32 %v174, 8388607
    %v176 = vor.u32 %v175, 8388608
    %v177 = vsub.s32 0, %v176
    %v178 = vadd.s32 %v173, 1
    %vm179 = vcmp.gt.s32.totalorder %v178, 0
    %v180 = vsel %vm179, %v178, 0
    %v181 = vshrl.u32 %v180, 5
    %v182 = vand.u32 %v180, 31
    %v183 = vsub.s32 32, %v182
    %v184 = vshrl.u32 683565275, %v183
    %v185 = vshll.u32 683565275, %v182
    %v186 = vshrl.u32 2475754826, %v183
    %v187 = vor.u32 %v185, %v186
    %v188 = vshll.u32 2475754826, %v182
    %v189 = vshrl.u32 2131351028, %v183
    %v190 = vor.u32 %v188, %v189
    %v191 = vshll.u32 2131351028, %v182
    %v192 = vshrl.u32 2102212464, %v183
    %v193 = vor.u32 %v191, %v192
    %v194 = vshll.u32 2102212464, %v182
    %v195 = vshrl.u32 920167782, %v183
    %v196 = vor.u32 %v194, %v195
    %v197 = vshll.u32 920167782, %v182
    %v198 = vshrl.u32 1326507024, %v183
    %v199 = vor.u32 %v197, %v198
    %vm200 = vcmp.lt.s32.totalorder %v181, 1
    %vm201 = vcmp.lt.s32.totalorder %v181, 2
    %vm202 = vcmp.lt.s32.totalorder %v181, 3
    %vm203 = vcmp.lt.s32.totalorder %v181, 4
    %v204 = vsel %vm200, %v184, %v187
    %v205 = vsel %vm203, %v193, 2102212464
    %v206 = vsel %vm202, %v190, %v205
    %v207 = vsel %vm201, %v204, %v206
    %v208 = vsel %vm200, %v187, %v190
    %v209 = vsel %vm203, %v196, 920167782
    %v210 = vsel %vm202, %v193, %v209
    %v211 = vsel %vm201, %v208, %v210
    %v212 = vsel %vm200, %v190, %v193
    %v213 = vsel %vm203, %v199, 1326507024
    %v214 = vsel %vm202, %v196, %v213
    %v215 = vsel %vm201, %v212, %v214
    %v216 = vshll.u32 %v176, 8
    %v217 = vmul.u32.u64.compose %v216, %v215
    %v218 = vextract.low.u32 %v217
    %v219 = vextract.high.u32 %v217
    %v220 = vmul.u32.u64.compose %v216, %v211
    %v221 = vextract.low.u32 %v220
    %v222 = vextract.high.u32 %v220
    %v223 = vmul.u32 %v216, %v207
    %v224 = vadd.s32 %v219, %v221
    %vm225 = vc.u32 %v219, %v221
    %v226 = vadd.s32 %v222, 1
    %v227 = vsel %vm225, %v226, %v222
    %v228 = vadd.s32 %v223, %v227
    %v229 = vadd.s32 %v228, 536870912
    %v230 = vshrl.u32 %v229, 30
    %v231 = vshll.u32 %v230, 30
    %v232 = vsub.s32 %v228, %v231
    %vm233 = vcmp.lt.s32.totalorder %v232, 0
    %v234 = vsub.s32 0, %v232
    %v235 = vsel %vm233, %v234, %v232
    %v236 = vclz %v235
    %v237 = vsub.s32 %v236, 2
    %vm238 = vcmp.gt.s32.totalorder 0, %v237
    %v239 = vsel %vm238, 0, %v237
    %v240 = vsub.s32 32, %v239
    %v241 = vshll.u32 %v232, %v239
    %v242 = vshrl.u32 %v224, %v240
    %v243 = vor.u32 %v241, %v242
    %v244 = vsub.s32 4294967266, %v239
    %v245 = vadd.s32 %v244, 127
    %v246 = vshll.u32 %v245, 23
    %v247 = vor.u32 4788187, %v246
    %v248 = vand.u32 2147483647, %v247
    %v250 = vcvt.s32.f32 %v243
    %v251 = vmul.f32 %v250, %v248
    %v252 = vxor.u32 %v251, 2147483648
    %v253 = vsel %vm170, %v252, %v251
    %v254 = vsub.s32 4, %v230
    %v255 = vsel %vm170, %v254, %v230
    %v256 = vsel %vm169, %v160, %v253
    %v257 = vsel %vm169, 0, %v255
    %v258 = vcosq.f32.pop %v256
    %v259 = vsinq.f32.pop %v256
    %vm260 = vweird.f32 %v160
    %v261 = vadd.s32 %v257, 3
    %v262 = vand.u32 %v261, 3
    %vm263 = vcmp.lt.s32.totalorder %v262, 2
    %vm264 = vcmp.eq.s32.totalorder %v262, 0
    %v265 = vxor.u32 %v259, 2147483648
    %v266 = vsel %vm264, %v258, %v265
    %vm267 = vcmp.eq.s32.totalorder %v262, 2
    %v268 = vxor.u32 %v258, 2147483648
    %v269 = vsel %vm267, %v268, %v259
    %v270 = vsel %vm263, %v266, %v269
    %v271 = vsel %vm260, nan, %v270
    %v272 = vand.u32 2147483647, %v161
    %vm273 = vcmp.le.f32.partialorder %v272, 0.7853982
    %vm274 = vcmp.lt.s32.totalorder %v161, 0
    %v275 = vand.u32 %v161, 2139095040
    %v276 = vshrl.u32 %v275, 23
    %v277 = vsub.s32 %v276, 127
    %v278 = vand.u32 2147483647, %v161
    %v279 = vand.u32 %v278, 8388607
    %v280 = vor.u32 %v279, 8388608
    %v281 = vsub.s32 0, %v280
    %v282 = vadd.s32 %v277, 1
    %vm283 = vcmp.gt.s32.totalorder %v282, 0
    %v284 = vsel %vm283, %v282, 0
    %v285 = vshrl.u32 %v284, 5
    %v286 = vand.u32 %v284, 31
    %v287 = vsub.s32 32, %v286
    %v288 = vshrl.u32 683565275, %v287
    %v289 = vshll.u32 683565275, %v286
    %v290 = vshrl.u32 2475754826, %v287
    %v291 = vor.u32 %v289, %v290
    %v292 = vshll.u32 2475754826, %v286
    %v293 = vshrl.u32 2131351028, %v287
    %v294 = vor.u32 %v292, %v293
    %v295 = vshll.u32 2131351028, %v286
    %v296 = vshrl.u32 2102212464, %v287
    %v297 = vor.u32 %v295, %v296
    %v298 = vshll.u32 2102212464, %v286
    %v299 = vshrl.u32 920167782, %v287
    %v300 = vor.u32 %v298, %v299
    %v301 = vshll.u32 920167782, %v286
    %v302 = vshrl.u32 1326507024, %v287
    %v303 = vor.u32 %v301, %v302
    %vm304 = vcmp.lt.s32.totalorder %v285, 1
    %vm305 = vcmp.lt.s32.totalorder %v285, 2
    %vm306 = vcmp.lt.s32.totalorder %v285, 3
    %vm307 = vcmp.lt.s32.totalorder %v285, 4
    %v308 = vsel %vm304, %v288, %v291
    %v309 = vsel %vm307, %v297, 2102212464
    %v310 = vsel %vm306, %v294, %v309
    %v311 = vsel %vm305, %v308, %v310
    %v312 = vsel %vm304, %v291, %v294
    %v313 = vsel %vm307, %v300, 920167782
    %v314 = vsel %vm306, %v297, %v313
    %v315 = vsel %vm305, %v312, %v314
    %v316 = vsel %vm304, %v294, %v297
    %v317 = vsel %vm307, %v303, 1326507024
    %v318 = vsel %vm306, %v300, %v317
    %v319 = vsel %vm305, %v316, %v318
    %v320 = vshll.u32 %v280, 8
    %v321 = vmul.u32.u64.compose %v320, %v319
    %v322 = vextract.low.u32 %v321
    %v323 = vextract.high.u32 %v321
    %v324 = vmul.u32.u64.compose %v320, %v315
    %v325 = vextract.low.u32 %v324
    %v326 = vextract.high.u32 %v324
    %v327 = vmul.u32 %v320, %v311
    %v328 = vadd.s32 %v323, %v325
    %vm329 = vc.u32 %v323, %v325
    %v330 = vadd.s32 %v326, 1
    %v331 = vsel %vm329, %v330, %v326
    %v332 = vadd.s32 %v327, %v331
    %v333 = vadd.s32 %v332, 536870912
    %v334 = vshrl.u32 %v333, 30
    %v335 = vshll.u32 %v334, 30
    %v336 = vsub.s32 %v332, %v335
    %vm337 = vcmp.lt.s32.totalorder %v336, 0
    %v338 = vsub.s32 0, %v336
    %v339 = vsel %vm337, %v338, %v336
    %v340 = vclz %v339
    %v341 = vsub.s32 %v340, 2
    %vm342 = vcmp.gt.s32.totalorder 0, %v341
    %v343 = vsel %vm342, 0, %v341
    %v344 = vsub.s32 32, %v343
    %v345 = vshll.u32 %v336, %v343
    %v346 = vshrl.u32 %v328, %v344
    %v347 = vor.u32 %v345, %v346
    %v348 = vsub.s32 4294967266, %v343
    %v349 = vadd.s32 %v348, 127
    %v350 = vshll.u32 %v349, 23
    %v351 = vor.u32 4788187, %v350
    %v352 = vand.u32 2147483647, %v351
    %v354 = vcvt.s32.f32 %v347
    %v355 = vmul.f32 %v354, %v352
    %v356 = vxor.u32 %v355, 2147483648
    %v357 = vsel %vm274, %v356, %v355
    %v358 = vsub.s32 4, %v334
    %v359 = vsel %vm274, %v358, %v334
    %v360 = vsel %vm273, %v161, %v357
    %v361 = vsel %vm273, 0, %v359
    %v362 = vcosq.f32.pop %v360
    %v363 = vsinq.f32.pop %v360
    %vm364 = vweird.f32 %v161
    %v365 = vadd.s32 %v361, 3
    %v366 = vand.u32 %v365, 3
    %vm367 = vcmp.lt.s32.totalorder %v366, 2
    %vm368 = vcmp.eq.s32.totalorder %v366, 0
    %v369 = vxor.u32 %v363, 2147483648
    %v370 = vsel %vm368, %v362, %v369
    %vm371 = vcmp.eq.s32.totalorder %v366, 2
    %v372 = vxor.u32 %v362, 2147483648
    %v373 = vsel %vm371, %v372, %v363
    %v374 = vsel %vm367, %v370, %v373
    %v375 = vsel %vm364, nan, %v374
    %v376 = vand.u32 2147483647, %v162
    %vm377 = vcmp.le.f32.partialorder %v376, 0.7853982
    %vm378 = vcmp.lt.s32.totalorder %v162, 0
    %v379 = vand.u32 %v162, 2139095040
    %v380 = vshrl.u32 %v379, 23
    %v381 = vsub.s32 %v380, 127
    %v382 = vand.u32 2147483647, %v162
    %v383 = vand.u32 %v382, 8388607
    %v384 = vor.u32 %v383, 8388608
    %v385 = vsub.s32 0, %v384
    %v386 = vadd.s32 %v381, 1
    %vm387 = vcmp.gt.s32.totalorder %v386, 0
    %v388 = vsel %vm387, %v386, 0
    %v389 = vshrl.u32 %v388, 5
    %v390 = vand.u32 %v388, 31
    %v391 = vsub.s32 32, %v390
    %v392 = vshrl.u32 683565275, %v391
    %v393 = vshll.u32 683565275, %v390
    %v394 = vshrl.u32 2475754826, %v391
    %v395 = vor.u32 %v393, %v394
    %v396 = vshll.u32 2475754826, %v390
    %v397 = vshrl.u32 2131351028, %v391
    %v398 = vor.u32 %v396, %v397
    %v399 = vshll.u32 2131351028, %v390
    %v400 = vshrl.u32 2102212464, %v391
    %v401 = vor.u32 %v399, %v400
    %v402 = vshll.u32 2102212464, %v390
    %v403 = vshrl.u32 920167782, %v391
    %v404 = vor.u32 %v402, %v403
    %v405 = vshll.u32 920167782, %v390
    %v406 = vshrl.u32 1326507024, %v391
    %v407 = vor.u32 %v405, %v406
    %vm408 = vcmp.lt.s32.totalorder %v389, 1
    %vm409 = vcmp.lt.s32.totalorder %v389, 2
    %vm410 = vcmp.lt.s32.totalorder %v389, 3
    %vm411 = vcmp.lt.s32.totalorder %v389, 4
    %v412 = vsel %vm408, %v392, %v395
    %v413 = vsel %vm411, %v401, 2102212464
    %v414 = vsel %vm410, %v398, %v413
    %v415 = vsel %vm409, %v412, %v414
    %v416 = vsel %vm408, %v395, %v398
    %v417 = vsel %vm411, %v404, 920167782
    %v418 = vsel %vm410, %v401, %v417
    %v419 = vsel %vm409, %v416, %v418
    %v420 = vsel %vm408, %v398, %v401
    %v421 = vsel %vm411, %v407, 1326507024
    %v422 = vsel %vm410, %v404, %v421
    %v423 = vsel %vm409, %v420, %v422
    %v424 = vshll.u32 %v384, 8
    %v425 = vmul.u32.u64.compose %v424, %v423
    %v426 = vextract.low.u32 %v425
    %v427 = vextract.high.u32 %v425
    %v428 = vmul.u32.u64.compose %v424, %v419
    %v429 = vextract.low.u32 %v428
    %v430 = vextract.high.u32 %v428
    %v431 = vmul.u32 %v424, %v415
    %v432 = vadd.s32 %v427, %v429
    %vm433 = vc.u32 %v427, %v429
    %v434 = vadd.s32 %v430, 1
    %v435 = vsel %vm433, %v434, %v430
    %v436 = vadd.s32 %v431, %v435
    %v437 = vadd.s32 %v436, 536870912
    %v438 = vshrl.u32 %v437, 30
    %v439 = vshll.u32 %v438, 30
    %v440 = vsub.s32 %v436, %v439
    %vm441 = vcmp.lt.s32.totalorder %v440, 0
    %v442 = vsub.s32 0, %v440
    %v443 = vsel %vm441, %v442, %v440
    %v444 = vclz %v443
    %v445 = vsub.s32 %v444, 2
    %vm446 = vcmp.gt.s32.totalorder 0, %v445
    %v447 = vsel %vm446, 0, %v445
    %v448 = vsub.s32 32, %v447
    %v449 = vshll.u32 %v440, %v447
    %v450 = vshrl.u32 %v432, %v448
    %v451 = vor.u32 %v449, %v450
    %v452 = vsub.s32 4294967266, %v447
    %v453 = vadd.s32 %v452, 127
    %v454 = vshll.u32 %v453, 23
    %v455 = vor.u32 4788187, %v454
    %v456 = vand.u32 2147483647, %v455
    %v458 = vcvt.s32.f32 %v451
    %v459 = vmul.f32 %v458, %v456
    %v460 = vxor.u32 %v459, 2147483648
    %v461 = vsel %vm378, %v460, %v459
    %v462 = vsub.s32 4, %v438
    %v463 = vsel %vm378, %v462, %v438
    %v464 = vsel %vm377, %v162, %v461
    %v465 = vsel %vm377, 0, %v463
    %v466 = vcosq.f32.pop %v464
    %v467 = vsinq.f32.pop %v464
    %vm468 = vweird.f32 %v162
    %v469 = vadd.s32 %v465, 3
    %v470 = vand.u32 %v469, 3
    %vm471 = vcmp.lt.s32.totalorder %v470, 2
    %vm472 = vcmp.eq.s32.totalorder %v470, 0
    %v473 = vxor.u32 %v467, 2147483648
    %v474 = vsel %vm472, %v466, %v473
    %vm475 = vcmp.eq.s32.totalorder %v470, 2
    %v476 = vxor.u32 %v466, 2147483648
    %v477 = vsel %vm475, %v476, %v467
    %v478 = vsel %vm471, %v474, %v477
    %v479 = vsel %vm468, nan, %v478
    %v480 = vand.u32 2147483647, %v163
    %vm481 = vcmp.le.f32.partialorder %v480, 0.7853982
    %vm482 = vcmp.lt.s32.totalorder %v163, 0
    %v483 = vand.u32 %v163, 2139095040
    %v484 = vshrl.u32 %v483, 23
    %v485 = vsub.s32 %v484, 127
    %v486 = vand.u32 2147483647, %v163
    %v487 = vand.u32 %v486, 8388607
    %v488 = vor.u32 %v487, 8388608
    %v489 = vsub.s32 0, %v488
    %v490 = vadd.s32 %v485, 1
    %vm491 = vcmp.gt.s32.totalorder %v490, 0
    %v492 = vsel %vm491, %v490, 0
    %v493 = vshrl.u32 %v492, 5
    %v494 = vand.u32 %v492, 31
    %v495 = vsub.s32 32, %v494
    %v496 = vshrl.u32 683565275, %v495
    %v497 = vshll.u32 683565275, %v494
    %v498 = vshrl.u32 2475754826, %v495
    %v499 = vor.u32 %v497, %v498
    %v500 = vshll.u32 2475754826, %v494
    %v501 = vshrl.u32 2131351028, %v495
    %v502 = vor.u32 %v500, %v501
    %v503 = vshll.u32 2131351028, %v494
    %v504 = vshrl.u32 2102212464, %v495
    %v505 = vor.u32 %v503, %v504
    %v506 = vshll.u32 2102212464, %v494
    %v507 = vshrl.u32 920167782, %v495
    %v508 = vor.u32 %v506, %v507
    %v509 = vshll.u32 920167782, %v494
    %v510 = vshrl.u32 1326507024, %v495
    %v511 = vor.u32 %v509, %v510
    %vm512 = vcmp.lt.s32.totalorder %v493, 1
    %vm513 = vcmp.lt.s32.totalorder %v493, 2
    %vm514 = vcmp.lt.s32.totalorder %v493, 3
    %vm515 = vcmp.lt.s32.totalorder %v493, 4
    %v516 = vsel %vm512, %v496, %v499
    %v517 = vsel %vm515, %v505, 2102212464
    %v518 = vsel %vm514, %v502, %v517
    %v519 = vsel %vm513, %v516, %v518
    %v520 = vsel %vm512, %v499, %v502
    %v521 = vsel %vm515, %v508, 920167782
    %v522 = vsel %vm514, %v505, %v521
    %v523 = vsel %vm513, %v520, %v522
    %v524 = vsel %vm512, %v502, %v505
    %v525 = vsel %vm515, %v511, 1326507024
    %v526 = vsel %vm514, %v508, %v525
    %v527 = vsel %vm513, %v524, %v526
    %v528 = vshll.u32 %v488, 8
    %v529 = vmul.u32.u64.compose %v528, %v527
    %v530 = vextract.low.u32 %v529
    %v531 = vextract.high.u32 %v529
    %v532 = vmul.u32.u64.compose %v528, %v523
    %v533 = vextract.low.u32 %v532
    %v534 = vextract.high.u32 %v532
    %v535 = vmul.u32 %v528, %v519
    %v536 = vadd.s32 %v531, %v533
    %vm537 = vc.u32 %v531, %v533
    %v538 = vadd.s32 %v534, 1
    %v539 = vsel %vm537, %v538, %v534
    %v540 = vadd.s32 %v535, %v539
    %v541 = vadd.s32 %v540, 536870912
    %v542 = vshrl.u32 %v541, 30
    %v543 = vshll.u32 %v542, 30
    %v544 = vsub.s32 %v540, %v543
    %vm545 = vcmp.lt.s32.totalorder %v544, 0
    %v546 = vsub.s32 0, %v544
    %v547 = vsel %vm545, %v546, %v544
    %v548 = vclz %v547
    %v549 = vsub.s32 %v548, 2
    %vm550 = vcmp.gt.s32.totalorder 0, %v549
    %v551 = vsel %vm550, 0, %v549
    %v552 = vsub.s32 32, %v551
    %v553 = vshll.u32 %v544, %v551
    %v554 = vshrl.u32 %v536, %v552
    %v555 = vor.u32 %v553, %v554
    %v556 = vsub.s32 4294967266, %v551
    %v557 = vadd.s32 %v556, 127
    %v558 = vshll.u32 %v557, 23
    %v559 = vor.u32 4788187, %v558
    %v560 = vand.u32 2147483647, %v559
    %v562 = vcvt.s32.f32 %v555
    %v563 = vmul.f32 %v562, %v560
    %v564 = vxor.u32 %v563, 2147483648
    %v565 = vsel %vm482, %v564, %v563
    %v566 = vsub.s32 4, %v542
    %v567 = vsel %vm482, %v566, %v542
    %v568 = vsel %vm481, %v163, %v565
    %v569 = vsel %vm481, 0, %v567
    %v570 = vcosq.f32.pop %v568
    %v571 = vsinq.f32.pop %v568
    %vm572 = vweird.f32 %v163
    %v573 = vadd.s32 %v569, 3
    %v574 = vand.u32 %v573, 3
    %vm575 = vcmp.lt.s32.totalorder %v574, 2
    %vm576 = vcmp.eq.s32.totalorder %v574, 0
    %v577 = vxor.u32 %v571, 2147483648
    %v578 = vsel %vm576, %v570, %v577
    %vm579 = vcmp.eq.s32.totalorder %v574, 2
    %v580 = vxor.u32 %v570, 2147483648
    %v581 = vsel %vm579, %v580, %v571
    %v582 = vsel %vm575, %v578, %v581
    %v583 = vsel %vm572, nan, %v582
    %v584 = vand.u32 2147483647, %v164
    %vm585 = vcmp.le.f32.partialorder %v584, 0.7853982
    %vm586 = vcmp.lt.s32.totalorder %v164, 0
    %v587 = vand.u32 %v164, 2139095040
    %v588 = vshrl.u32 %v587, 23
    %v589 = vsub.s32 %v588, 127
    %v590 = vand.u32 2147483647, %v164
    %v591 = vand.u32 %v590, 8388607
    %v592 = vor.u32 %v591, 8388608
    %v593 = vsub.s32 0, %v592
    %v594 = vadd.s32 %v589, 1
    %vm595 = vcmp.gt.s32.totalorder %v594, 0
    %v596 = vsel %vm595, %v594, 0
    %v597 = vshrl.u32 %v596, 5
    %v598 = vand.u32 %v596, 31
    %v599 = vsub.s32 32, %v598
    %v600 = vshrl.u32 683565275, %v599
    %v601 = vshll.u32 683565275, %v598
    %v602 = vshrl.u32 2475754826, %v599
    %v603 = vor.u32 %v601, %v602
    %v604 = vshll.u32 2475754826, %v598
    %v605 = vshrl.u32 2131351028, %v599
    %v606 = vor.u32 %v604, %v605
    %v607 = vshll.u32 2131351028, %v598
    %v608 = vshrl.u32 2102212464, %v599
    %v609 = vor.u32 %v607, %v608
    %v610 = vshll.u32 2102212464, %v598
    %v611 = vshrl.u32 920167782, %v599
    %v612 = vor.u32 %v610, %v611
    %v613 = vshll.u32 920167782, %v598
    %v614 = vshrl.u32 1326507024, %v599
    %v615 = vor.u32 %v613, %v614
    %vm616 = vcmp.lt.s32.totalorder %v597, 1
    %vm617 = vcmp.lt.s32.totalorder %v597, 2
    %vm618 = vcmp.lt.s32.totalorder %v597, 3
    %vm619 = vcmp.lt.s32.totalorder %v597, 4
    %v620 = vsel %vm616, %v600, %v603
    %v621 = vsel %vm619, %v609, 2102212464
    %v622 = vsel %vm618, %v606, %v621
    %v623 = vsel %vm617, %v620, %v622
    %v624 = vsel %vm616, %v603, %v606
    %v625 = vsel %vm619, %v612, 920167782
    %v626 = vsel %vm618, %v609, %v625
    %v627 = vsel %vm617, %v624, %v626
    %v628 = vsel %vm616, %v606, %v609
    %v629 = vsel %vm619, %v615, 1326507024
    %v630 = vsel %vm618, %v612, %v629
    %v631 = vsel %vm617, %v628, %v630
    %v632 = vshll.u32 %v592, 8
    %v633 = vmul.u32.u64.compose %v632, %v631
    %v634 = vextract.low.u32 %v633
    %v635 = vextract.high.u32 %v633
    %v636 = vmul.u32.u64.compose %v632, %v627
    %v637 = vextract.low.u32 %v636
    %v638 = vextract.high.u32 %v636
    %v639 = vmul.u32 %v632, %v623
    %v640 = vadd.s32 %v635, %v637
    %vm641 = vc.u32 %v635, %v637
    %v642 = vadd.s32 %v638, 1
    %v643 = vsel %vm641, %v642, %v638
    %v644 = vadd.s32 %v639, %v643
    %v645 = vadd.s32 %v644, 536870912
    %v646 = vshrl.u32 %v645, 30
    %v647 = vshll.u32 %v646, 30
    %v648 = vsub.s32 %v644, %v647
    %vm649 = vcmp.lt.s32.totalorder %v648, 0
    %v650 = vsub.s32 0, %v648
    %v651 = vsel %vm649, %v650, %v648
    %v652 = vclz %v651
    %v653 = vsub.s32 %v652, 2
    %vm654 = vcmp.gt.s32.totalorder 0, %v653
    %v655 = vsel %vm654, 0, %v653
    %v656 = vsub.s32 32, %v655
    %v657 = vshll.u32 %v648, %v655
    %v658 = vshrl.u32 %v640, %v656
    %v659 = vor.u32 %v657, %v658
    %v660 = vsub.s32 4294967266, %v655
    %v661 = vadd.s32 %v660, 127
    %v662 = vshll.u32 %v661, 23
    %v663 = vor.u32 4788187, %v662
    %v664 = vand.u32 2147483647, %v663
    %v666 = vcvt.s32.f32 %v659
    %v667 = vmul.f32 %v666, %v664
    %v668 = vxor.u32 %v667, 2147483648
    %v669 = vsel %vm586, %v668, %v667
    %v670 = vsub.s32 4, %v646
    %v671 = vsel %vm586, %v670, %v646
    %v672 = vsel %vm585, %v164, %v669
    %v673 = vsel %vm585, 0, %v671
    %v674 = vcosq.f32.pop %v672
    %v675 = vsinq.f32.pop %v672
    %vm676 = vweird.f32 %v164
    %v677 = vadd.s32 %v673, 3
    %v678 = vand.u32 %v677, 3
    %vm679 = vcmp.lt.s32.totalorder %v678, 2
    %vm680 = vcmp.eq.s32.totalorder %v678, 0
    %v681 = vxor.u32 %v675, 2147483648
    %v682 = vsel %vm680, %v674, %v681
    %vm683 = vcmp.eq.s32.totalorder %v678, 2
    %v684 = vxor.u32 %v674, 2147483648
    %v685 = vsel %vm683, %v684, %v675
    %v686 = vsel %vm679, %v682, %v685
    %v687 = vsel %vm676, nan, %v686
    %v688 = vand.u32 2147483647, %v165
    %vm689 = vcmp.le.f32.partialorder %v688, 0.7853982
    %vm690 = vcmp.lt.s32.totalorder %v165, 0
    %v691 = vand.u32 %v165, 2139095040
    %v692 = vshrl.u32 %v691, 23
    %v693 = vsub.s32 %v692, 127
    %v694 = vand.u32 2147483647, %v165
    %v695 = vand.u32 %v694, 8388607
    %v696 = vor.u32 %v695, 8388608
    %v697 = vsub.s32 0, %v696
    %v698 = vadd.s32 %v693, 1
    %vm699 = vcmp.gt.s32.totalorder %v698, 0
    %v700 = vsel %vm699, %v698, 0
    %v701 = vshrl.u32 %v700, 5
    %v702 = vand.u32 %v700, 31
    %v703 = vsub.s32 32, %v702
    %v704 = vshrl.u32 683565275, %v703
    %v705 = vshll.u32 683565275, %v702
    %v706 = vshrl.u32 2475754826, %v703
    %v707 = vor.u32 %v705, %v706
    %v708 = vshll.u32 2475754826, %v702
    %v709 = vshrl.u32 2131351028, %v703
    %v710 = vor.u32 %v708, %v709
    %v711 = vshll.u32 2131351028, %v702
    %v712 = vshrl.u32 2102212464, %v703
    %v713 = vor.u32 %v711, %v712
    %v714 = vshll.u32 2102212464, %v702
    %v715 = vshrl.u32 920167782, %v703
    %v716 = vor.u32 %v714, %v715
    %v717 = vshll.u32 920167782, %v702
    %v718 = vshrl.u32 1326507024, %v703
    %v719 = vor.u32 %v717, %v718
    %vm720 = vcmp.lt.s32.totalorder %v701, 1
    %vm721 = vcmp.lt.s32.totalorder %v701, 2
    %vm722 = vcmp.lt.s32.totalorder %v701, 3
    %vm723 = vcmp.lt.s32.totalorder %v701, 4
    %v724 = vsel %vm720, %v704, %v707
    %v725 = vsel %vm723, %v713, 2102212464
    %v726 = vsel %vm722, %v710, %v725
    %v727 = vsel %vm721, %v724, %v726
    %v728 = vsel %vm720, %v707, %v710
    %v729 = vsel %vm723, %v716, 920167782
    %v730 = vsel %vm722, %v713, %v729
    %v731 = vsel %vm721, %v728, %v730
    %v732 = vsel %vm720, %v710, %v713
    %v733 = vsel %vm723, %v719, 1326507024
    %v734 = vsel %vm722, %v716, %v733
    %v735 = vsel %vm721, %v732, %v734
    %v736 = vshll.u32 %v696, 8
    %v737 = vmul.u32.u64.compose %v736, %v735
    %v738 = vextract.low.u32 %v737
    %v739 = vextract.high.u32 %v737
    %v740 = vmul.u32.u64.compose %v736, %v731
    %v741 = vextract.low.u32 %v740
    %v742 = vextract.high.u32 %v740
    %v743 = vmul.u32 %v736, %v727
    %v744 = vadd.s32 %v739, %v741
    %vm745 = vc.u32 %v739, %v741
    %v746 = vadd.s32 %v742, 1
    %v747 = vsel %vm745, %v746, %v742
    %v748 = vadd.s32 %v743, %v747
    %v749 = vadd.s32 %v748, 536870912
    %v750 = vshrl.u32 %v749, 30
    %v751 = vshll.u32 %v750, 30
    %v752 = vsub.s32 %v748, %v751
    %vm753 = vcmp.lt.s32.totalorder %v752, 0
    %v754 = vsub.s32 0, %v752
    %v755 = vsel %vm753, %v754, %v752
    %v756 = vclz %v755
    %v757 = vsub.s32 %v756, 2
    %vm758 = vcmp.gt.s32.totalorder 0, %v757
    %v759 = vsel %vm758, 0, %v757
    %v760 = vsub.s32 32, %v759
    %v761 = vshll.u32 %v752, %v759
    %v762 = vshrl.u32 %v744, %v760
    %v763 = vor.u32 %v761, %v762
    %v764 = vsub.s32 4294967266, %v759
    %v765 = vadd.s32 %v764, 127
    %v766 = vshll.u32 %v765, 23
    %v767 = vor.u32 4788187, %v766
    %v768 = vand.u32 2147483647, %v767
    %v770 = vcvt.s32.f32 %v763
    %v771 = vmul.f32 %v770, %v768
    %v772 = vxor.u32 %v771, 2147483648
    %v773 = vsel %vm690, %v772, %v771
    %v774 = vsub.s32 4, %v750
    %v775 = vsel %vm690, %v774, %v750
    %v776 = vsel %vm689, %v165, %v773
    %v777 = vsel %vm689, 0, %v775
    %v778 = vcosq.f32.pop %v776
    %v779 = vsinq.f32.pop %v776
    %vm780 = vweird.f32 %v165
    %v781 = vadd.s32 %v777, 3
    %v782 = vand.u32 %v781, 3
    %vm783 = vcmp.lt.s32.totalorder %v782, 2
    %vm784 = vcmp.eq.s32.totalorder %v782, 0
    %v785 = vxor.u32 %v779, 2147483648
    %v786 = vsel %vm784, %v778, %v785
    %vm787 = vcmp.eq.s32.totalorder %v782, 2
    %v788 = vxor.u32 %v778, 2147483648
    %v789 = vsel %vm787, %v788, %v779
    %v790 = vsel %vm783, %v786, %v789
    %v791 = vsel %vm780, nan, %v790
    %v792 = vand.u32 2147483647, %v166
    %vm793 = vcmp.le.f32.partialorder %v792, 0.7853982
    %vm794 = vcmp.lt.s32.totalorder %v166, 0
    %v795 = vand.u32 %v166, 2139095040
    %v796 = vshrl.u32 %v795, 23
    %v797 = vsub.s32 %v796, 127
    %v798 = vand.u32 2147483647, %v166
    %v799 = vand.u32 %v798, 8388607
    %v800 = vor.u32 %v799, 8388608
    %v801 = vsub.s32 0, %v800
    %v802 = vadd.s32 %v797, 1
    %vm803 = vcmp.gt.s32.totalorder %v802, 0
    %v804 = vsel %vm803, %v802, 0
    %v805 = vshrl.u32 %v804, 5
    %v806 = vand.u32 %v804, 31
    %v807 = vsub.s32 32, %v806
    %v808 = vshrl.u32 683565275, %v807
    %v809 = vshll.u32 683565275, %v806
    %v810 = vshrl.u32 2475754826, %v807
    %v811 = vor.u32 %v809, %v810
    %v812 = vshll.u32 2475754826, %v806
    %v813 = vshrl.u32 2131351028, %v807
    %v814 = vor.u32 %v812, %v813
    %v815 = vshll.u32 2131351028, %v806
    %v816 = vshrl.u32 2102212464, %v807
    %v817 = vor.u32 %v815, %v816
    %v818 = vshll.u32 2102212464, %v806
    %v819 = vshrl.u32 920167782, %v807
    %v820 = vor.u32 %v818, %v819
    %v821 = vshll.u32 920167782, %v806
    %v822 = vshrl.u32 1326507024, %v807
    %v823 = vor.u32 %v821, %v822
    %vm824 = vcmp.lt.s32.totalorder %v805, 1
    %vm825 = vcmp.lt.s32.totalorder %v805, 2
    %vm826 = vcmp.lt.s32.totalorder %v805, 3
    %vm827 = vcmp.lt.s32.totalorder %v805, 4
    %v828 = vsel %vm824, %v808, %v811
    %v829 = vsel %vm827, %v817, 2102212464
    %v830 = vsel %vm826, %v814, %v829
    %v831 = vsel %vm825, %v828, %v830
    %v832 = vsel %vm824, %v811, %v814
    %v833 = vsel %vm827, %v820, 920167782
    %v834 = vsel %vm826, %v817, %v833
    %v835 = vsel %vm825, %v832, %v834
    %v836 = vsel %vm824, %v814, %v817
    %v837 = vsel %vm827, %v823, 1326507024
    %v838 = vsel %vm826, %v820, %v837
    %v839 = vsel %vm825, %v836, %v838
    %v840 = vshll.u32 %v800, 8
    %v841 = vmul.u32.u64.compose %v840, %v839
    %v842 = vextract.low.u32 %v841
    %v843 = vextract.high.u32 %v841
    %v844 = vmul.u32.u64.compose %v840, %v835
    %v845 = vextract.low.u32 %v844
    %v846 = vextract.high.u32 %v844
    %v847 = vmul.u32 %v840, %v831
    %v848 = vadd.s32 %v843, %v845
    %vm849 = vc.u32 %v843, %v845
    %v850 = vadd.s32 %v846, 1
    %v851 = vsel %vm849, %v850, %v846
    %v852 = vadd.s32 %v847, %v851
    %v853 = vadd.s32 %v852, 536870912
    %v854 = vshrl.u32 %v853, 30
    %v855 = vshll.u32 %v854, 30
    %v856 = vsub.s32 %v852, %v855
    %vm857 = vcmp.lt.s32.totalorder %v856, 0
    %v858 = vsub.s32 0, %v856
    %v859 = vsel %vm857, %v858, %v856
    %v860 = vclz %v859
    %v861 = vsub.s32 %v860, 2
    %vm862 = vcmp.gt.s32.totalorder 0, %v861
    %v863 = vsel %vm862, 0, %v861
    %v864 = vsub.s32 32, %v863
    %v865 = vshll.u32 %v856, %v863
    %v866 = vshrl.u32 %v848, %v864
    %v867 = vor.u32 %v865, %v866
    %v868 = vsub.s32 4294967266, %v863
    %v869 = vadd.s32 %v868, 127
    %v870 = vshll.u32 %v869, 23
    %v871 = vor.u32 4788187, %v870
    %v872 = vand.u32 2147483647, %v871
    %v874 = vcvt.s32.f32 %v867
    %v875 = vmul.f32 %v874, %v872
    %v876 = vxor.u32 %v875, 2147483648
    %v877 = vsel %vm794, %v876, %v875
    %v878 = vsub.s32 4, %v854
    %v879 = vsel %vm794, %v878, %v854
    %v880 = vsel %vm793, %v166, %v877
    %v881 = vsel %vm793, 0, %v879
    %v882 = vcosq.f32.pop %v880
    %v883 = vsinq.f32.pop %v880
    %vm884 = vweird.f32 %v166
    %v885 = vadd.s32 %v881, 3
    %v886 = vand.u32 %v885, 3
    %vm887 = vcmp.lt.s32.totalorder %v886, 2
    %vm888 = vcmp.eq.s32.totalorder %v886, 0
    %v889 = vxor.u32 %v883, 2147483648
    %v890 = vsel %vm888, %v882, %v889
    %vm891 = vcmp.eq.s32.totalorder %v886, 2
    %v892 = vxor.u32 %v882, 2147483648
    %v893 = vsel %vm891, %v892, %v883
    %v894 = vsel %vm887, %v890, %v893
    %v895 = vsel %vm884, nan, %v894
    %v896 = vand.u32 2147483647, %v167
    %vm897 = vcmp.le.f32.partialorder %v896, 0.7853982
    %vm898 = vcmp.lt.s32.totalorder %v167, 0
    %v899 = vand.u32 %v167, 2139095040
    %v900 = vshrl.u32 %v899, 23
    %v901 = vsub.s32 %v900, 127
    %v902 = vand.u32 2147483647, %v167
    %v903 = vand.u32 %v902, 8388607
    %v904 = vor.u32 %v903, 8388608
    %v905 = vsub.s32 0, %v904
    %v906 = vadd.s32 %v901, 1
    %vm907 = vcmp.gt.s32.totalorder %v906, 0
    %v908 = vsel %vm907, %v906, 0
    %v909 = vshrl.u32 %v908, 5
    %v910 = vand.u32 %v908, 31
    %v911 = vsub.s32 32, %v910
    %v912 = vshrl.u32 683565275, %v911
    %v913 = vshll.u32 683565275, %v910
    %v914 = vshrl.u32 2475754826, %v911
    %v915 = vor.u32 %v913, %v914
    %v916 = vshll.u32 2475754826, %v910
    %v917 = vshrl.u32 2131351028, %v911
    %v918 = vor.u32 %v916, %v917
    %v919 = vshll.u32 2131351028, %v910
    %v920 = vshrl.u32 2102212464, %v911
    %v921 = vor.u32 %v919, %v920
    %v922 = vshll.u32 2102212464, %v910
    %v923 = vshrl.u32 920167782, %v911
    %v924 = vor.u32 %v922, %v923
    %v925 = vshll.u32 920167782, %v910
    %v926 = vshrl.u32 1326507024, %v911
    %v927 = vor.u32 %v925, %v926
    %vm928 = vcmp.lt.s32.totalorder %v909, 1
    %vm929 = vcmp.lt.s32.totalorder %v909, 2
    %vm930 = vcmp.lt.s32.totalorder %v909, 3
    %vm931 = vcmp.lt.s32.totalorder %v909, 4
    %v932 = vsel %vm928, %v912, %v915
    %v933 = vsel %vm931, %v921, 2102212464
    %v934 = vsel %vm930, %v918, %v933
    %v935 = vsel %vm929, %v932, %v934
    %v936 = vsel %vm928, %v915, %v918
    %v937 = vsel %vm931, %v924, 920167782
    %v938 = vsel %vm930, %v921, %v937
    %v939 = vsel %vm929, %v936, %v938
    %v940 = vsel %vm928, %v918, %v921
    %v941 = vsel %vm931, %v927, 1326507024
    %v942 = vsel %vm930, %v924, %v941
    %v943 = vsel %vm929, %v940, %v942
    %v944 = vshll.u32 %v904, 8
    %v945 = vmul.u32.u64.compose %v944, %v943
    %v946 = vextract.low.u32 %v945
    %v947 = vextract.high.u32 %v945
    %v948 = vmul.u32.u64.compose %v944, %v939
    %v949 = vextract.low.u32 %v948
    %v950 = vextract.high.u32 %v948
    %v951 = vmul.u32 %v944, %v935
    %v952 = vadd.s32 %v947, %v949
    %vm953 = vc.u32 %v947, %v949
    %v954 = vadd.s32 %v950, 1
    %v955 = vsel %vm953, %v954, %v950
    %v956 = vadd.s32 %v951, %v955
    %v957 = vadd.s32 %v956, 536870912
    %v958 = vshrl.u32 %v957, 30
    %v959 = vshll.u32 %v958, 30
    %v960 = vsub.s32 %v956, %v959
    %vm961 = vcmp.lt.s32.totalorder %v960, 0
    %v962 = vsub.s32 0, %v960
    %v963 = vsel %vm961, %v962, %v960
    %v964 = vclz %v963
    %v965 = vsub.s32 %v964, 2
    %vm966 = vcmp.gt.s32.totalorder 0, %v965
    %v967 = vsel %vm966, 0, %v965
    %v968 = vsub.s32 32, %v967
    %v969 = vshll.u32 %v960, %v967
    %v970 = vshrl.u32 %v952, %v968
    %v971 = vor.u32 %v969, %v970
    %v972 = vsub.s32 4294967266, %v967
    %v973 = vadd.s32 %v972, 127
    %v974 = vshll.u32 %v973, 23
    %v975 = vor.u32 4788187, %v974
    %v976 = vand.u32 2147483647, %v975
    %v978 = vcvt.s32.f32 %v971
    %v979 = vmul.f32 %v978, %v976
    %v980 = vxor.u32 %v979, 2147483648
    %v981 = vsel %vm898, %v980, %v979
    %v982 = vsub.s32 4, %v958
    %v983 = vsel %vm898, %v982, %v958
    %v984 = vsel %vm897, %v167, %v981
    %v985 = vsel %vm897, 0, %v983
    %v986 = vcosq.f32.pop %v984
    %v987 = vsinq.f32.pop %v984
    %vm988 = vweird.f32 %v167
    %v989 = vadd.s32 %v985, 3
    %v990 = vand.u32 %v989, 3
    %vm991 = vcmp.lt.s32.totalorder %v990, 2
    %vm992 = vcmp.eq.s32.totalorder %v990, 0
    %v993 = vxor.u32 %v987, 2147483648
    %v994 = vsel %vm992, %v986, %v993
    %vm995 = vcmp.eq.s32.totalorder %v990, 2
    %v996 = vxor.u32 %v986, 2147483648
    %v997 = vsel %vm995, %v996, %v987
    %v998 = vsel %vm991, %v994, %v997
    %v999 = vsel %vm988, nan, %v998
    %1001 = vset.pattern.permute.xlu0 0
    %1002 = vperm.xlu0 %1001, %v38
    %v1003 = vpop.permute.xlu0 %1002
    %1006 = vset.pattern.permute.xlu0 0
    %1007 = vperm.xlu0 %1006, %v39
    %v1008 = vpop.permute.xlu0 %1007
    %1011 = vset.pattern.permute.xlu0 0
    %1012 = vperm.xlu0 %1011, %v40
    %v1013 = vpop.permute.xlu0 %1012
    %1016 = vset.pattern.permute.xlu0 0
    %1017 = vperm.xlu0 %1016, %v41
    %v1018 = vpop.permute.xlu0 %1017
    %1021 = vset.pattern.permute.xlu0 0
    %1022 = vperm.xlu0 %1021, %v42
    %v1023 = vpop.permute.xlu0 %1022
    %1026 = vset.pattern.permute.xlu0 0
    %1027 = vperm.xlu0 %1026, %v43
    %v1028 = vpop.permute.xlu0 %1027
    %1031 = vset.pattern.permute.xlu0 0
    %1032 = vperm.xlu0 %1031, %v44
    %v1033 = vpop.permute.xlu0 %1032
    %1036 = vset.pattern.permute.xlu0 0
    %1037 = vperm.xlu0 %1036, %v45
    %v1038 = vpop.permute.xlu0 %1037
    %vm1040 = vcmask 39936
    %v1042 = vsel %vm1040, %v30, 0
    %v1045 = vsel %vm1040, %v31, 0
    %v1048 = vsel %vm1040, %v32, 0
    %v1051 = vsel %vm1040, %v33, 0
    %v1054 = vsel %vm1040, %v34, 0
    %v1057 = vsel %vm1040, %v35, 0
    %v1060 = vsel %vm1040, %v36, 0
    %v1063 = vsel %vm1040, %v37, 0
    %v1066 = vsel %vm1040, %v64, 0
    %1068 = vmatprep.subr.mxu0 0.0
    %1069 = vmatpush1.xpose.msra.mxu0 %v1066
    %1070 = vmatprep.subr.mxu0 0.0
    %1071 = vmatpush1.xpose.msra.mxu0 0.0
    %1072 = vmatprep.subr.mxu0 0.0
    %1073 = vmatpush1.xpose.msra.mxu0 0.0
    %1074 = vmatprep.subr.mxu0 0.0
    %1075 = vmatpush1.xpose.msra.mxu0 0.0
    %1076 = vmatprep.subr.mxu0 0.0
    %1077 = vmatpush1.xpose.msra.mxu0 0.0
    %1078 = vmatprep.subr.mxu0 0.0
    %1079 = vmatpush1.xpose.msra.mxu0 0.0
    %1080 = vmatprep.subr.mxu0 0.0
    %1081 = vmatpush1.xpose.msra.mxu0 0.0
    %1082 = vmatprep.subr.mxu0 0.0
    %1083 = vmatpush1.xpose.msra.mxu0 0.0
    %1084 = vmatprep.subr.mxu0 0.0
    %1085 = vmatpush1.xpose.msra.mxu0 0.0
    %1086 = vmatprep.subr.mxu0 0.0
    %1087 = vmatpush1.xpose.msra.mxu0 0.0
    %1088 = vmatprep.subr.mxu0 0.0
    %1089 = vmatpush1.xpose.msra.mxu0 0.0
    %1090 = vmatprep.subr.mxu0 0.0
    %1091 = vmatpush1.xpose.msra.mxu0 0.0
    %1092 = vmatprep.subr.mxu0 0.0
    %1093 = vmatpush1.xpose.msra.mxu0 0.0
    %1094 = vmatprep.subr.mxu0 0.0
    %1095 = vmatpush1.xpose.msra.mxu0 0.0
    %1096 = vmatprep.subr.mxu0 0.0
    %1097 = vmatpush1.xpose.msra.mxu0 0.0
    %1098 = vmatprep.subr.mxu0 0.0
    %1099 = vmatpush1.xpose.msra.mxu0 0.0
    %1100 = vmatprep.subr.mxu0 0.0
    %1101 = vmatpush1.xpose.msra.mxu0 0.0
    %1102 = vmatprep.subr.mxu0 0.0
    %1103 = vmatpush1.xpose.msra.mxu0 0.0
    %1104 = vmatprep.subr.mxu0 0.0
    %1105 = vmatpush1.xpose.msra.mxu0 0.0
    %1106 = vmatprep.subr.mxu0 0.0
    %1107 = vmatpush1.xpose.msra.mxu0 0.0
    %1108 = vmatprep.subr.mxu0 0.0
    %1109 = vmatpush1.xpose.msra.mxu0 0.0
    %1110 = vmatprep.subr.mxu0 0.0
    %1111 = vmatpush1.xpose.msra.mxu0 0.0
    %1112 = vmatprep.subr.mxu0 0.0
    %1113 = vmatpush1.xpose.msra.mxu0 0.0
    %1114 = vmatprep.subr.mxu0 0.0
    %1115 = vmatpush1.xpose.msra.mxu0 0.0
    %1116 = vmatprep.subr.mxu0 0.0
    %1117 = vmatpush1.xpose.msra.mxu0 0.0
    %1118 = vmatprep.subr.mxu0 0.0
    %1119 = vmatpush1.xpose.msra.mxu0 0.0
    %1120 = vmatprep.subr.mxu0 0.0
    %1121 = vmatpush1.xpose.msra.mxu0 0.0
    %1122 = vmatprep.subr.mxu0 0.0
    %1123 = vmatpush1.xpose.msra.mxu0 0.0
    %1124 = vmatprep.subr.mxu0 0.0
    %1125 = vmatpush1.xpose.msra.mxu0 0.0
    %1126 = vmatprep.subr.mxu0 0.0
    %1127 = vmatpush1.xpose.msra.mxu0 0.0
    %1128 = vmatprep.subr.mxu0 0.0
    %1129 = vmatpush1.xpose.msra.mxu0 0.0
    %1130 = vmatprep.subr.mxu0 0.0
    %1131 = vmatpush1.xpose.msra.mxu0 0.0
    %1132 = vmatprep.mubr.f32.mxu0 0.0
    %1133 = vmatmul.mubr.f32.gmra.mrb[0].mxu0 %v1042
    %v1134 = vpop.f32.mrb[0].mxu0
    %v1135 = vadd.f32 %v1003, %v1134
    %v1136 = vpop.f32.mrb[0].mxu0
    %1137 = vmatprep.mubr.f32.mxu0 0.0
    %1138 = vmatmul.mubr.f32.gmra.mrb[0].mxu0 %v1045
    %v1139 = vpop.f32.mrb[0].mxu0
    %v1140 = vadd.f32 %v1008, %v1139
    %v1141 = vpop.f32.mrb[0].mxu0
    %1142 = vmatprep.mubr.f32.mxu0 0.0
    %1143 = vmatmul.mubr.f32.gmra.mrb[0].mxu0 %v1048
    %v1144 = vpop.f32.mrb[0].mxu0
    %v1145 = vadd.f32 %v1013, %v1144
    %v1146 = vpop.f32.mrb[0].mxu0
    %1147 = vmatprep.mubr.f32.mxu0 0.0
    %1148 = vmatmul.mubr.f32.gmra.mrb[0].mxu0 %v1051
    %v1149 = vpop.f32.mrb[0].mxu0
    %v1150 = vadd.f32 %v1018, %v1149
    %v1151 = vpop.f32.mrb[0].mxu0
    %1152 = vmatprep.mubr.f32.mxu0 0.0
    %1153 = vmatmul.mubr.f32.gmra.mrb[0].mxu0 %v1054
    %v1154 = vpop.f32.mrb[0].mxu0
    %v1155 = vadd.f32 %v1023, %v1154
    %v1156 = vpop.f32.mrb[0].mxu0
    %1157 = vmatprep.mubr.f32.mxu0 0.0
    %1158 = vmatmul.mubr.f32.gmra.mrb[0].mxu0 %v1057
    %v1159 = vpop.f32.mrb[0].mxu0
    %v1160 = vadd.f32 %v1028, %v1159
    %v1161 = vpop.f32.mrb[0].mxu0
    %1162 = vmatprep.mubr.f32.mxu0 0.0
    %1163 = vmatmul.mubr.f32.gmra.mrb[0].mxu0 %v1060
    %v1164 = vpop.f32.mrb[0].mxu0
    %v1165 = vadd.f32 %v1033, %v1164
    %v1166 = vpop.f32.mrb[0].mxu0
    %1167 = vmatprep.mubr.f32.mxu0 0.0
    %1168 = vmatmul.mubr.f32.gmra.mrb[0].mxu0 %v1063
    %v1169 = vpop.f32.mrb[0].mxu0
    %v1170 = vadd.f32 %v1038, %v1169
    %v1171 = vpop.f32.mrb[0].mxu0
    %1172 = vdwg.mxu0
    %v1173 = vadd.f32 %v1135, %v271
    %v1174 = vadd.f32 %v1140, %v375
    %v1175 = vadd.f32 %v1145, %v479
    %v1176 = vadd.f32 %v1150, %v583
    %v1177 = vadd.f32 %v1155, %v687
    %v1178 = vadd.f32 %v1160, %v791
    %v1179 = vadd.f32 %v1165, %v895
    %v1180 = vadd.f32 %v1170, %v999
    %v1181 = vmax.f32 %v1173, 0.0
    %v1182 = vmax.f32 %v1174, 0.0
    %v1183 = vmax.f32 %v1175, 0.0
    %v1184 = vmax.f32 %v1176, 0.0
    %v1185 = vmax.f32 %v1177, 0.0
    %v1186 = vmax.f32 %v1178, 0.0
    %v1187 = vmax.f32 %v1179, 0.0
    %v1188 = vmax.f32 %v1180, 0.0
    %v1190 = vlaneseq
    %v1191 = vshrl.u32 %v1190, 7
    %v1192 = vsub.s32 0, %v1191
    %v1193 = vrot.slane %v47, %v1192
    %1195 = vxpose.xlu0.b32.start [1/16] %v1181, 128
    %1196 = vxpose.xlu0.b32.cont [2/16] %v1182, 128
    %1197 = vxpose.xlu0.b32.cont [3/16] %v1183, 128
    %1198 = vxpose.xlu0.b32.cont [4/16] %v1184, 128
    %1199 = vxpose.xlu0.b32.cont [5/16] %v1185, 128
    %1200 = vxpose.xlu0.b32.cont [6/16] %v1186, 128
    %1201 = vxpose.xlu0.b32.cont [7/16] %v1187, 128
    %1202 = vxpose.xlu0.b32.cont [8/16] %v1188, 128
    %1203 = vxpose.xlu0.b32.cont [9/16] 0.0, 128
    %1204 = vxpose.xlu0.b32.cont [10/16] 0.0, 128
    %1205 = vxpose.xlu0.b32.cont [11/16] 0.0, 128
    %1206 = vxpose.xlu0.b32.cont [12/16] 0.0, 128
    %1207 = vxpose.xlu0.b32.cont [13/16] 0.0, 128
    %1208 = vxpose.xlu0.b32.cont [14/16] 0.0, 128
    %1209 = vxpose.xlu0.b32.cont [15/16] 0.0, 128
    %1210 = vxpose.xlu0.b32.end [16/16] 0.0, 128
    %v1211 = vpop.trf.xlu0
    %v1212 = vpop.trf.xlu0
    %v1213 = vpop.trf.xlu0
    %v1214 = vpop.trf.xlu0
    %v1215 = vpop.trf.xlu0
    %v1216 = vpop.trf.xlu0
    %v1217 = vpop.trf.xlu0
    %v1218 = vpop.trf.xlu0
    %v1219 = vpop.trf.xlu0
    %v1220 = vpop.trf.xlu0
    %v1221 = vpop.trf.xlu0
    %v1222 = vpop.trf.xlu0
    %v1223 = vpop.trf.xlu0
    %v1224 = vpop.trf.xlu0
    %v1225 = vpop.trf.xlu0
    %v1226 = vpop.trf.xlu0
    %vm1227 = vcmask 523264
    %v1229 = vsel %vm1227, %v1211, 0
    %v1232 = vsel %vm1227, %v46, 0
    %1234 = vmatprep.subr.mxu0 0.0
    %1235 = vmatpush1.xpose.msra.mxu0 %v1232
    %1236 = vmatprep.subr.mxu0 0.0
    %1237 = vmatpush1.xpose.msra.mxu0 0.0
    %1238 = vmatprep.subr.mxu0 0.0
    %1239 = vmatpush1.xpose.msra.mxu0 0.0
    %1240 = vmatprep.subr.mxu0 0.0
    %1241 = vmatpush1.xpose.msra.mxu0 0.0
    %1242 = vmatprep.subr.mxu0 0.0
    %1243 = vmatpush1.xpose.msra.mxu0 0.0
    %1244 = vmatprep.subr.mxu0 0.0
    %1245 = vmatpush1.xpose.msra.mxu0 0.0
    %1246 = vmatprep.subr.mxu0 0.0
    %1247 = vmatpush1.xpose.msra.mxu0 0.0
    %1248 = vmatprep.subr.mxu0 0.0
    %1249 = vmatpush1.xpose.msra.mxu0 0.0
    %1250 = vmatprep.subr.mxu0 0.0
    %1251 = vmatpush1.xpose.msra.mxu0 0.0
    %1252 = vmatprep.subr.mxu0 0.0
    %1253 = vmatpush1.xpose.msra.mxu0 0.0
    %1254 = vmatprep.subr.mxu0 0.0
    %1255 = vmatpush1.xpose.msra.mxu0 0.0
    %1256 = vmatprep.subr.mxu0 0.0
    %1257 = vmatpush1.xpose.msra.mxu0 0.0
    %1258 = vmatprep.subr.mxu0 0.0
    %1259 = vmatpush1.xpose.msra.mxu0 0.0
    %1260 = vmatprep.subr.mxu0 0.0
    %1261 = vmatpush1.xpose.msra.mxu0 0.0
    %1262 = vmatprep.subr.mxu0 0.0
    %1263 = vmatpush1.xpose.msra.mxu0 0.0
    %1264 = vmatprep.subr.mxu0 0.0
    %1265 = vmatpush1.xpose.msra.mxu0 0.0
    %1266 = vmatprep.subr.mxu0 0.0
    %1267 = vmatpush1.xpose.msra.mxu0 0.0
    %1268 = vmatprep.subr.mxu0 0.0
    %1269 = vmatpush1.xpose.msra.mxu0 0.0
    %1270 = vmatprep.subr.mxu0 0.0
    %1271 = vmatpush1.xpose.msra.mxu0 0.0
    %1272 = vmatprep.subr.mxu0 0.0
    %1273 = vmatpush1.xpose.msra.mxu0 0.0
    %1274 = vmatprep.subr.mxu0 0.0
    %1275 = vmatpush1.xpose.msra.mxu0 0.0
    %1276 = vmatprep.subr.mxu0 0.0
    %1277 = vmatpush1.xpose.msra.mxu0 0.0
    %1278 = vmatprep.subr.mxu0 0.0
    %1279 = vmatpush1.xpose.msra.mxu0 0.0
    %1280 = vmatprep.subr.mxu0 0.0
    %1281 = vmatpush1.xpose.msra.mxu0 0.0
    %1282 = vmatprep.subr.mxu0 0.0
    %1283 = vmatpush1.xpose.msra.mxu0 0.0
    %1284 = vmatprep.subr.mxu0 0.0
    %1285 = vmatpush1.xpose.msra.mxu0 0.0
    %1286 = vmatprep.subr.mxu0 0.0
    %1287 = vmatpush1.xpose.msra.mxu0 0.0
    %1288 = vmatprep.subr.mxu0 0.0
    %1289 = vmatpush1.xpose.msra.mxu0 0.0
    %1290 = vmatprep.subr.mxu0 0.0
    %1291 = vmatpush1.xpose.msra.mxu0 0.0
    %1292 = vmatprep.subr.mxu0 0.0
    %1293 = vmatpush1.xpose.msra.mxu0 0.0
    %1294 = vmatprep.subr.mxu0 0.0
    %1295 = vmatpush1.xpose.msra.mxu0 0.0
    %1296 = vmatprep.subr.mxu0 0.0
    %1297 = vmatpush1.xpose.msra.mxu0 0.0
    %1298 = vmatprep.mubr.f32.mxu0 0.0
    %1299 = vmatmul.mubr.f32.gmra.mrb[0].mxu0 %v1229
    %v1300 = vpop.f32.mrb[0].mxu0
    %v1301 = vadd.f32 %v1193, %v1300
    %v1302 = vpop.f32.mrb[0].mxu0
    %1303 = vdwg.mxu0
    %1304 = vst.msk [vmem:[#allocation2] sm:$0xff] %vm1040, %v1301
    // Predicated region
    $region34: #{tpu_custom_call.1} parent=1 // pred_check
      _
    $region35: #{tpu_custom_call.1} parent=1 // pred_check_branch
      %1306 = sbr.rel (0) target = $region37
    $region36: #{tpu_custom_call.1} parent=1 // pred_region
      %s1308 = ssub.s32 128, 128
      %1309 = vsyncadd [#allocation3], %s1308
      %s1311 = sshll.u32 [#allocation2], 4
      %s1312 = int_to_ptr.vmem [resolvable:$true] %s1311
      %1314 = dma.vmem_to_hbm [thread:$0]  %s1312, 128, %s8, [#allocation3]
    $region37: #{tpu_custom_call.1} parent=1 // pred_fallthru
      _
    // Predicated region
    $region38: #{tpu_custom_call.1} parent=1 // pred_check
      _
    $region39: #{tpu_custom_call.1} parent=1 // pred_check_branch
      %1316 = sbr.rel (0) target = $region41
    $region40: #{tpu_custom_call.1} parent=1 // pred_region
      %1317 = dma.done [#allocation3], 128
    $region41: #{tpu_custom_call.1} parent=1 // pred_fallthru
      _
    %1318 = vsyncpa [#allocation3], 1

</llo_original>
